<compile_context>
chip_gen: v5e
topology: v5e:2x2
jax: 0.10.0
libtpu: 0.0.40
codegen_flags: <defaults>
</compile_context>

<pallas_src>
import jax
import jax.numpy as jnp
from jax.experimental import pallas as pl
from jax.experimental.pallas import tpu as pltpu
import numpy as np


def _attn_kernel(x_ref, wqkv_ref, bqkv_ref, out_ref, attn_ref):
    # x_ref block: (bb, S, F); wqkv block: (F, 3F); bqkv block: (1, 3F)
    bb, S, F = x_ref.shape

    # Fused Q/K/V projection: one (bb*S, F) x (F, 3F) matmul on the MXU.
    x2 = x_ref[...].reshape(bb * S, F)
    qkv = jnp.dot(x2, wqkv_ref[...],
                  preferred_element_type=jnp.float32) + bqkv_ref[...]
    q = qkv[:, 0 * F:1 * F].reshape(bb, S, F)
    k = qkv[:, 1 * F:2 * F].reshape(bb, S, F)
    v = qkv[:, 2 * F:3 * F].reshape(bb, S, F)

    scale = 1.0 / jnp.sqrt(jnp.float32(F))
    # Contract on K's last dim directly — no materialized transpose (XLU-free).
    scores = jnp.einsum("bqd,bkd->bqk", q, k,
                        preferred_element_type=jnp.float32) * scale  # (bb,S,S)

    # TODO(synk): optional attention mask (mask==0 -> -1e9) not plumbed in;
    # the reference forward is exercised with mask=None.

    # Numerically-stable softmax over the last (key) axis.
    m = jnp.max(scores, axis=-1, keepdims=True)
    e = jnp.exp(scores - m)
    d = jnp.sum(e, axis=-1, keepdims=True)
    r = pl.reciprocal(d, approx=True)      # EUP vrcp (own VLIW slot)
    r = r * (2.0 - d * r)                  # one Newton step -> ~f32 accuracy
    w = e * r                              # (bb, S, S)

    attn_ref[...] = w.astype(attn_ref.dtype)
    out_ref[...] = jnp.einsum("bqk,bkd->bqd", w, v,
                              preferred_element_type=jnp.float32
                              ).astype(out_ref.dtype)


def _batch_block(B):
    """v7x has 2 TensorCores per chip: keep a per-batch parallel grid so both
    cores get work.  Single-TC chips (v5e/v6e): collapse the grid to one step
    to eliminate per-grid-step overhead on this overhead-bound problem."""
    try:
        kind = jax.devices()[0].device_kind.lower()
    except Exception:
        kind = ""
    return 1 if "v7" in kind else B


def self_attention_pallas(x, wq, bq, wk, bk, wv, bv):
    """x: (B, S, F) float32.  wq/wk/wv: (F, F) pre-transposed (in, out).
    bq/bk/bv: (1, F).  Returns (output (B,S,F), attention_weights (B,S,S))."""
    B, S, F = x.shape

    # Fuse the three projections once, outside the kernel.
    w_qkv = jnp.concatenate([wq, wk, wv], axis=1)   # (F, 3F)
    b_qkv = jnp.concatenate([bq, bk, bv], axis=1)   # (1, 3F)

    bb = _batch_block(B)
    grid = (B // bb,)

    x_spec = pl.BlockSpec((bb, S, F), lambda b: (b, 0, 0))
    w_spec = pl.BlockSpec((F, 3 * F), lambda b: (0, 0))
    bias_spec = pl.BlockSpec((1, 3 * F), lambda b: (0, 0))
    out_spec = pl.BlockSpec((bb, S, F), lambda b: (b, 0, 0))
    attn_spec = pl.BlockSpec((bb, S, S), lambda b: (b, 0, 0))

    return pl.pallas_call(
        _attn_kernel,
        out_shape=(
            jax.ShapeDtypeStruct((B, S, F), jnp.float32),
            jax.ShapeDtypeStruct((B, S, S), jnp.float32),
        ),
        grid_spec=pltpu.PrefetchScalarGridSpec(
            num_scalar_prefetch=0,
            grid=grid,
            in_specs=[x_spec, w_spec, bias_spec],
            out_specs=[out_spec, attn_spec],
        ),
        compiler_params=pltpu.CompilerParams(
            dimension_semantics=("parallel",)),
    )(x, w_qkv, b_qkv)


def _reference(x, wq, bq, wk, bk, wv, bv):
    F = x.shape[-1]
    q = x @ wq + bq
    k = x @ wk + bk
    v = x @ wv + bv
    scores = jnp.einsum("bqd,bkd->bqk", q, k) / jnp.sqrt(jnp.float32(F))
    w = jax.nn.softmax(scores, axis=-1)
    return jnp.einsum("bqk,bkd->bqd", w, v), w


if __name__ == "__main__":
    B, S, F = 2, 8, 32  # batch, seq, feature_size

    key = jax.random.PRNGKey(0)
    kx, kq, kk, kv, kbq, kbk, kbv = jax.random.split(key, 7)

    x = jax.random.normal(kx, (B, S, F), dtype=jnp.float32)

    # nn.Linear(feature_size, feature_size): weight (out,in), bias (out,)
    # Stored here pre-transposed -> (in, out), biases as (1, out).
    lim = 1.0 / np.sqrt(F)
    wq = jax.random.uniform(kq, (F, F), jnp.float32, -lim, lim)
    wk = jax.random.uniform(kk, (F, F), jnp.float32, -lim, lim)
    wv = jax.random.uniform(kv, (F, F), jnp.float32, -lim, lim)
    bq = jax.random.uniform(kbq, (1, F), jnp.float32, -lim, lim)
    bk = jax.random.uniform(kbk, (1, F), jnp.float32, -lim, lim)
    bv = jax.random.uniform(kbv, (1, F), jnp.float32, -lim, lim)

    out, attn = self_attention_pallas(x, wq, bq, wk, bk, wv, bv)
    jax.block_until_ready((out, attn))

    ref_out, ref_attn = _reference(x, wq, bq, wk, bk, wv, bv)
    np.testing.assert_allclose(np.asarray(out), np.asarray(ref_out),
                               rtol=1e-5, atol=1e-5)
    np.testing.assert_allclose(np.asarray(attn), np.asarray(ref_attn),
                               rtol=1e-5, atol=1e-5)

    print("KERNEL_OK")
</pallas_src>

<mosaic_0001>
module attributes {stable_mosaic.version = 11 : i64} {
  func.func @_attn_kernel(%arg0: i32, %arg1: memref<2x8x32xf32, #tpu.memory_space<vmem>>, %arg2: memref<32x96xf32, #tpu.memory_space<vmem>>, %arg3: memref<1x96xf32, #tpu.memory_space<vmem>>, %arg4: memref<2x8x32xf32, #tpu.memory_space<vmem>>, %arg5: memref<2x8x8xf32, #tpu.memory_space<vmem>>) attributes {dimension_semantics = [#tpu.dimension_semantics<parallel>], iteration_bounds = array<i64: 1>, scalar_prefetch = 0 : i64, scratch_operands = 0 : i64, tpu.core_type = #tpu.core_type<tc>, window_params = [{transform_indices = @transform_0, window_bounds = array<i64: 2, 8, 32>}, {pipeline_mode = #tpu.pipeline_mode<synchronous>, transform_indices = @transform_1, window_bounds = array<i64: 32, 96>}, {pipeline_mode = #tpu.pipeline_mode<synchronous>, transform_indices = @transform_2, window_bounds = array<i64: 1, 96>}, {transform_indices = @transform_3, window_bounds = array<i64: 2, 8, 32>}, {transform_indices = @transform_4, window_bounds = array<i64: 2, 8, 8>}]} {
    %c0 = arith.constant 0 : index
    %c0_0 = arith.constant 0 : index
    %c0_1 = arith.constant 0 : index
    %0 = vector.load %arg1[%c0, %c0_0, %c0_1] : memref<2x8x32xf32, #tpu.memory_space<vmem>>, vector<2x8x32xf32>
    %1 = vector.shape_cast %0 : vector<2x8x32xf32> to vector<16x32xf32>
    %c0_2 = arith.constant 0 : index
    %c0_3 = arith.constant 0 : index
    %2 = vector.load %arg2[%c0_2, %c0_3] : memref<32x96xf32, #tpu.memory_space<vmem>>, vector<32x96xf32>
    %cst = arith.constant dense<0.000000e+00> : vector<16x96xf32>
    %3 = tpu.matmul %1, %2, %cst {dimension_numbers = #tpu.dot_dimension_numbers<[1], [0], [0], [1], [0, 0, 1, 1], [], []>} : vector<16x32xf32>, vector<32x96xf32>, vector<16x96xf32> -> vector<16x96xf32>
    %c0_4 = arith.constant 0 : index
    %c0_5 = arith.constant 0 : index
    %4 = vector.load %arg3[%c0_4, %c0_5] : memref<1x96xf32, #tpu.memory_space<vmem>>, vector<1x96xf32>
    %5 = vector.broadcast %4 : vector<1x96xf32> to vector<16x96xf32>
    %6 = arith.addf %3, %5 : vector<16x96xf32>
    %7 = vector.extract_strided_slice %6 {offsets = [0, 0], sizes = [16, 32], strides = [1, 1]} : vector<16x96xf32> to vector<16x32xf32>
    %8 = vector.shape_cast %7 : vector<16x32xf32> to vector<2x8x32xf32>
    %9 = vector.extract_strided_slice %6 {offsets = [0, 32], sizes = [16, 32], strides = [1, 1]} : vector<16x96xf32> to vector<16x32xf32>
    %10 = vector.shape_cast %9 : vector<16x32xf32> to vector<2x8x32xf32>
    %11 = vector.extract_strided_slice %6 {offsets = [0, 64], sizes = [16, 32], strides = [1, 1]} : vector<16x96xf32> to vector<16x32xf32>
    %12 = vector.shape_cast %11 : vector<16x32xf32> to vector<2x8x32xf32>
    %cst_6 = arith.constant 3.200000e+01 : f32
    %13 = math.sqrt %cst_6 : f32
    %cst_7 = arith.constant 1.000000e+00 : f32
    %14 = arith.divf %cst_7, %13 : f32
    "tpu.trace_start"() <{level = 10 : i32, message = "bqd,bkd->bqk"}> : () -> ()
    %cst_8 = arith.constant dense<0.000000e+00> : vector<2x8x8xf32>
    %15 = tpu.matmul %8, %10, %cst_8 {dimension_numbers = #tpu.dot_dimension_numbers<[2], [2], [1], [1], [0, 0, 0, 1, 1, 1], [0], [0]>} : vector<2x8x32xf32>, vector<2x8x32xf32>, vector<2x8x8xf32> -> vector<2x8x8xf32>
    "tpu.trace_stop"() : () -> ()
    %16 = vector.broadcast %14 : f32 to vector<2x8x8xf32>
    %17 = arith.mulf %15, %16 : vector<2x8x8xf32>
    %cst_9 = arith.constant dense<0xFF800000> : vector<2x8xf32>
    %18 = vector.multi_reduction <maximumf>, %17, %cst_9 [2] : vector<2x8x8xf32> to vector<2x8xf32>
    %19 = vector.shape_cast %18 : vector<2x8xf32> to vector<2x8x1xf32>
    %20 = vector.broadcast %19 : vector<2x8x1xf32> to vector<2x8x8xf32>
    %21 = arith.subf %17, %20 : vector<2x8x8xf32>
    %22 = math.exp %21 : vector<2x8x8xf32>
    %cst_10 = arith.constant dense<0.000000e+00> : vector<2x8xf32>
    %23 = vector.multi_reduction <add>, %22, %cst_10 [2] : vector<2x8x8xf32> to vector<2x8xf32>
    %24 = vector.shape_cast %23 : vector<2x8xf32> to vector<2x8x1xf32>
    %25 = tpu.reciprocal %24 {approx = true} : vector<2x8x1xf32> -> vector<2x8x1xf32>
    %26 = arith.mulf %24, %25 : vector<2x8x1xf32>
    %cst_11 = arith.constant 2.000000e+00 : f32
    %27 = vector.broadcast %cst_11 : f32 to vector<2x8x1xf32>
    %28 = arith.subf %27, %26 : vector<2x8x1xf32>
    %29 = arith.mulf %25, %28 : vector<2x8x1xf32>
    %30 = vector.broadcast %29 : vector<2x8x1xf32> to vector<2x8x8xf32>
    %31 = arith.mulf %22, %30 : vector<2x8x8xf32>
    %c0_12 = arith.constant 0 : index
    %c0_13 = arith.constant 0 : index
    %c0_14 = arith.constant 0 : index
    %32 = vector.load %arg5[%c0_12, %c0_13, %c0_14] : memref<2x8x8xf32, #tpu.memory_space<vmem>>, vector<2x8x8xf32>
    tpu.vector_store %arg5[%c0_12, %c0_13, %c0_14], %31 {strides = array<i32>} : memref<2x8x8xf32, #tpu.memory_space<vmem>>, vector<2x8x8xf32>,
    "tpu.trace_start"() <{level = 10 : i32, message = "bqk,bkd->bqd"}> : () -> ()
    %cst_15 = arith.constant dense<0.000000e+00> : vector<2x8x32xf32>
    %33 = tpu.matmul %31, %12, %cst_15 {dimension_numbers = #tpu.dot_dimension_numbers<[2], [1], [1], [2], [0, 0, 0, 1, 1, 2], [0], [0]>} : vector<2x8x8xf32>, vector<2x8x32xf32>, vector<2x8x32xf32> -> vector<2x8x32xf32>
    "tpu.trace_stop"() : () -> ()
    %c0_16 = arith.constant 0 : index
    %c0_17 = arith.constant 0 : index
    %c0_18 = arith.constant 0 : index
    %34 = vector.load %arg4[%c0_16, %c0_17, %c0_18] : memref<2x8x32xf32, #tpu.memory_space<vmem>>, vector<2x8x32xf32>
    tpu.vector_store %arg4[%c0_16, %c0_17, %c0_18], %33 {strides = array<i32>} : memref<2x8x32xf32, #tpu.memory_space<vmem>>, vector<2x8x32xf32>,
    return
  }
  func.func @transform_0(%arg0: i32) -> (i32, i32, i32) {
    %c0_i32 = arith.constant 0 : i32
    %c0_i32_0 = arith.constant 0 : i32
    %c0_i32_1 = arith.constant 0 : i32
    return %arg0, %c0_i32, %c0_i32_0 : i32, i32, i32
  }
  func.func @transform_1(%arg0: i32) -> (i32, i32) {
    %c0_i32 = arith.constant 0 : i32
    %c0_i32_0 = arith.constant 0 : i32
    %c0_i32_1 = arith.constant 0 : i32
    return %c0_i32, %c0_i32_0 : i32, i32
  }
  func.func @transform_2(%arg0: i32) -> (i32, i32) {
    %c0_i32 = arith.constant 0 : i32
    %c0_i32_0 = arith.constant 0 : i32
    %c0_i32_1 = arith.constant 0 : i32
    return %c0_i32, %c0_i32_0 : i32, i32
  }
  func.func @transform_3(%arg0: i32) -> (i32, i32, i32) {
    %c0_i32 = arith.constant 0 : i32
    %c0_i32_0 = arith.constant 0 : i32
    %c0_i32_1 = arith.constant 0 : i32
    return %arg0, %c0_i32, %c0_i32_0 : i32, i32, i32
  }
  func.func @transform_4(%arg0: i32) -> (i32, i32, i32) {
    %c0_i32 = arith.constant 0 : i32
    %c0_i32_0 = arith.constant 0 : i32
    %c0_i32_1 = arith.constant 0 : i32
    return %arg0, %c0_i32, %c0_i32_0 : i32, i32, i32
  }
}

</mosaic_0001>

<llo_original>
// kernel: tpu_custom_call.1
$region0: #{tpu_custom_call.1}
  #allocation0 [shape = 'u32[]', space=smem, size = 0x4, offset = 0x4, fixed_abs, tag = 'smem constant byte address 0x4 - core index']
  #allocation1 [shape = 'u32[72,128]{1,0:T(1,128)}', space=vmem, size = 0x9000, scoped, tag = 'internal scratch']
  %s0 = inlined_call_operand.hbm [shape: f32[2,8,32], index: 0, kind: input, shape index: {}]
  %s1 = inlined_call_operand.hbm [shape: f32[32,96], index: 1, kind: input, shape index: {}]
  %s2 = inlined_call_operand.vmem [shape: f32[1,96], index: 2, kind: input, shape index: {}]
  %s3 = inlined_call_operand.hbm [shape: f32[2,8,32], index: 3, kind: output, shape index: {0}]
  %s4 = inlined_call_operand.hbm [shape: f32[2,8,8], index: 4, kind: output, shape index: {1}]
  %5 = xla_tuple %s3, %s4
  %s6 = sld [smem:[#allocation0]]
  $region38: #{tpu_custom_call.1} parent=0
    _
  %s8 = ssub.s32 1, %s6
  %s9 = scalar_select 0, %s8, %s6
  $region1: #{tpu_custom_call.1} parent=0
    #allocation2 [shape = 'u8[8192]{0}', space=vmem, size = 0x2000, scoped, tag = 'input window, operand 0, single buffered']
    #allocation3 [shape = 's32[1]{0}', space=sflag, size = 0x4, scoped, tag = 'scoped memory for tpu_custom_call.1']
    #allocation4 [shape = 's32[1]{0}', space=sflag, size = 0x4, scoped, tag = 'scoped memory for tpu_custom_call.1']
    #allocation5 [shape = 'u8[16384]{0}', space=vmem, size = 0x4000, scoped, tag = 'input window, operand 1, single buffered']
    #allocation6 [shape = 's32[1]{0}', space=sflag, size = 0x4, scoped, tag = 'scoped memory for tpu_custom_call.1']
    #allocation7 [shape = 'u8[8192]{0}', space=vmem, size = 0x2000, scoped, tag = 'output window, operand 0, single buffered']
    #allocation8 [shape = 'u8[8192]{0}', space=vmem, size = 0x2000, scoped, tag = 'output window, operand 1, single buffered']
    #allocation9 [shape = 's32[1]{0}', space=sflag, size = 0x4, scoped, tag = 'scoped memory for tpu_custom_call.1']
    %10 = vsyncpa [#allocation3], 0
    %11 = vsyncpa [#allocation6], 0
    %12 = vsyncpa [#allocation4], 0
    %13 = vsyncpa [#allocation9], 0
    // Predicated region
    $region2: #{tpu_custom_call.1} parent=1 // pred_check
      _
    $region3: #{tpu_custom_call.1} parent=1 // pred_check_branch
      %15 = sbr.rel (0) target = $region5
    $region4: #{tpu_custom_call.1} parent=1 // pred_region
      %17 = vsyncadd [#allocation3], 0
      %s18 = sshll.u32 %s0, 4
      %s19 = int_to_ptr.hbm [resolvable:$true] %s18
      %s20 = sshll.u32 [#allocation2], 4
      %s21 = int_to_ptr.vmem [resolvable:$true] %s20
      %26 = dma.hbm_to_vmem [thread:$0]  %s19, 256, %s21, [#allocation3], 128, 128, 8
    $region5: #{tpu_custom_call.1} parent=1 // pred_fallthru
      _
    // Predicated region
    $region6: #{tpu_custom_call.1} parent=1 // pred_check
      _
    $region7: #{tpu_custom_call.1} parent=1 // pred_check_branch
      %28 = sbr.rel (0) target = $region9
    $region8: #{tpu_custom_call.1} parent=1 // pred_region
      %30 = vsyncadd [#allocation6], 0
      %s31 = sshll.u32 %s1, 4
      %s32 = int_to_ptr.hbm [resolvable:$true] %s31
      %s33 = sshll.u32 [#allocation5], 4
      %s34 = int_to_ptr.vmem [resolvable:$true] %s33
      %39 = dma.hbm_to_vmem [thread:$0]  %s32, 512, %s34, [#allocation6], 128, 128, 8
    $region9: #{tpu_custom_call.1} parent=1 // pred_fallthru
      _
    // Predicated region
    $region10: #{tpu_custom_call.1} parent=1 // pred_check
      _
    $region11: #{tpu_custom_call.1} parent=1 // pred_check_branch
      %41 = sbr.rel (0) target = $region13
    $region12: #{tpu_custom_call.1} parent=1 // pred_region
      _
    $region13: #{tpu_custom_call.1} parent=1 // pred_fallthru
      _
    // Predicated region
    $region14: #{tpu_custom_call.1} parent=1 // pred_check
      _
    $region15: #{tpu_custom_call.1} parent=1 // pred_check_branch
      %43 = sbr.rel (0) target = $region17
    $region16: #{tpu_custom_call.1} parent=1 // pred_region
      %45 = dma.done [#allocation3], 256
    $region17: #{tpu_custom_call.1} parent=1 // pred_fallthru
      _
    // Predicated region
    $region18: #{tpu_custom_call.1} parent=1 // pred_check
      _
    $region19: #{tpu_custom_call.1} parent=1 // pred_check_branch
      %47 = sbr.rel (0) target = $region21
    $region20: #{tpu_custom_call.1} parent=1 // pred_region
      %49 = dma.done [#allocation6], 512
    $region21: #{tpu_custom_call.1} parent=1 // pred_fallthru
      _
    %v50 = vld [vmem:[#allocation2] sm:$0xff]
    %v51 = vld [vmem:[#allocation2 + $0x8] sm:$0xff]
    %v52 = vld [vmem:[#allocation5] sm:$0xff]
    %v53 = vld [vmem:[#allocation5 + $0x8] sm:$0xff]
    %v54 = vld [vmem:[#allocation5 + $0x10] sm:$0xff]
    %v55 = vld [vmem:[#allocation5 + $0x18] sm:$0xff]
    %v56 = vld [vmem:[%s2] sm:$0x1]
    %v58 = vperm.slane %v56, 0
    %vm60 = vcmask 261120
    %v62 = vsel %vm60, %v50, 0
    %v65 = vsel %vm60, %v51, 0
    %67 = vmatpush.msra.mxu0 0.0
    %68 = vmatpush.msra.mxu0 0.0
    %69 = vmatpush.msra.mxu0 0.0
    %70 = vmatpush.msra.mxu0 0.0
    %71 = vmatpush.msra.mxu0 0.0
    %72 = vmatpush.msra.mxu0 0.0
    %73 = vmatpush.msra.mxu0 0.0
    %74 = vmatpush.msra.mxu0 0.0
    %75 = vmatpush.msra.mxu0 0.0
    %76 = vmatpush.msra.mxu0 0.0
    %77 = vmatpush.msra.mxu0 0.0
    %78 = vmatpush.msra.mxu0 0.0
    %79 = vmatpush.msra.mxu0 %v55
    %80 = vmatpush.msra.mxu0 %v54
    %81 = vmatpush.msra.mxu0 %v53
    %82 = vmatpush.msra.mxu0 %v52
    %83 = vmatmul.f32.gmra.mxu0 %v62
    %v84 = vpop.f32.mrf.mxu0
    %v85 = vadd.f32 %v58, %v84
    %86 = vmatmul.f32.gmra.mxu0 %v65
    %v87 = vpop.f32.mrf.mxu0
    %v88 = vadd.f32 %v58, %v87
    %89 = vdwg.mxu0
    %91 = vrot.lane.b32.xlu0 %v85, 96
    %v92 = vpop.permute.xlu0 %91
    %v93 = vsel %vm60, %v85, 0
    %v95 = vsel %vm60, %v92, 0
    %97 = vmatpush.xpose.msra.mxu0 0.0
    %98 = vmatpush.xpose.msra.mxu0 0.0
    %99 = vmatpush.xpose.msra.mxu0 0.0
    %100 = vmatpush.xpose.msra.mxu0 0.0
    %101 = vmatpush.xpose.msra.mxu0 0.0
    %102 = vmatpush.xpose.msra.mxu0 0.0
    %103 = vmatpush.xpose.msra.mxu0 0.0
    %104 = vmatpush.xpose.msra.mxu0 0.0
    %105 = vmatpush.xpose.msra.mxu0 0.0
    %106 = vmatpush.xpose.msra.mxu0 0.0
    %107 = vmatpush.xpose.msra.mxu0 0.0
    %108 = vmatpush.xpose.msra.mxu0 0.0
    %109 = vmatpush.xpose.msra.mxu0 0.0
    %110 = vmatpush.xpose.msra.mxu0 0.0
    %111 = vmatpush.xpose.msra.mxu0 0.0
    %112 = vmatpush.xpose.msra.mxu0 %v95
    %113 = vmatmul.f32.gmra.mxu0 %v93
    %v114 = vpop.f32.mrf.mxu0
    %v115 = vadd.f32 0.0, %v114
    %116 = vdwg.mxu0
    %118 = vrot.lane.b32.xlu0 %v88, 96
    %v119 = vpop.permute.xlu0 %118
    %v120 = vsel %vm60, %v88, 0
    %v122 = vsel %vm60, %v119, 0
    %124 = vmatpush.xpose.msra.mxu0 0.0
    %125 = vmatpush.xpose.msra.mxu0 0.0
    %126 = vmatpush.xpose.msra.mxu0 0.0
    %127 = vmatpush.xpose.msra.mxu0 0.0
    %128 = vmatpush.xpose.msra.mxu0 0.0
    %129 = vmatpush.xpose.msra.mxu0 0.0
    %130 = vmatpush.xpose.msra.mxu0 0.0
    %131 = vmatpush.xpose.msra.mxu0 0.0
    %132 = vmatpush.xpose.msra.mxu0 0.0
    %133 = vmatpush.xpose.msra.mxu0 0.0
    %134 = vmatpush.xpose.msra.mxu0 0.0
    %135 = vmatpush.xpose.msra.mxu0 0.0
    %136 = vmatpush.xpose.msra.mxu0 0.0
    %137 = vmatpush.xpose.msra.mxu0 0.0
    %138 = vmatpush.xpose.msra.mxu0 0.0
    %139 = vmatpush.xpose.msra.mxu0 %v122
    %140 = vmatmul.f32.gmra.mxu0 %v120
    %v141 = vpop.f32.mrf.mxu0
    %v142 = vadd.f32 0.0, %v141
    %143 = vdwg.mxu0
    %v144 = vmul.f32 %v115, 0.17677669
    %v145 = vmul.f32 %v142, 0.17677669
    %vm146 = vcmask 64512
    %v147 = vsel %vm146, %v144, -inf
    %148 = vmax.xlane.f32.xlu0 %v147
    %v149 = vpop.xlane.xlu0 %148
    %v150 = vsel %vm146, %v145, -inf
    %151 = vmax.xlane.f32.xlu0 %v150
    %v152 = vpop.xlane.xlu0 %151
    %v153 = vsub.f32 %v144, %v149
    %v154 = vsub.f32 %v145, %v152
    %v155 = vmul.f32 %v153, 1.442695
    %v156 = vpow.pop %v155
    %v157 = vmul.f32 %v154, 1.442695
    %v158 = vpow.pop %v157
    %v159 = vsel %vm146, %v156, 0.0
    %160 = vadd.xlane.f32.xlu0 %v159
    %v161 = vpop.xlane.xlu0 %160
    %v162 = vsel %vm146, %v158, 0.0
    %163 = vadd.xlane.f32.xlu0 %v162
    %v164 = vpop.xlane.xlu0 %163
    %v165 = vrcp.pop %v161
    %v166 = vrcp.pop %v164
    %v167 = vmul.f32 %v161, %v165
    %v168 = vmul.f32 %v164, %v166
    %v169 = vsub.f32 2.0, %v167
    %v170 = vsub.f32 2.0, %v168
    %v171 = vmul.f32 %v165, %v169
    %v172 = vmul.f32 %v166, %v170
    %v173 = vmul.f32 %v156, %v171
    %v174 = vmul.f32 %v158, %v172
    %175 = vst.msk [vmem:[#allocation8] sm:$0xff] %vm146, %v173
    %176 = vst.msk [vmem:[#allocation8 + $0x8] sm:$0xff] %vm146, %v174
    %177 = vrot.lane.b32.xlu0 %v85, 64
    %v178 = vpop.permute.xlu0 %177
    %v181 = vsel %vm146, %v173, 0
    %183 = vmatpush.msra.mxu0 0.0
    %184 = vmatpush.msra.mxu0 0.0
    %185 = vmatpush.msra.mxu0 0.0
    %186 = vmatpush.msra.mxu0 0.0
    %187 = vmatpush.msra.mxu0 0.0
    %188 = vmatpush.msra.mxu0 0.0
    %189 = vmatpush.msra.mxu0 0.0
    %190 = vmatpush.msra.mxu0 0.0
    %191 = vmatpush.msra.mxu0 0.0
    %192 = vmatpush.msra.mxu0 0.0
    %193 = vmatpush.msra.mxu0 0.0
    %194 = vmatpush.msra.mxu0 0.0
    %195 = vmatpush.msra.mxu0 0.0
    %196 = vmatpush.msra.mxu0 0.0
    %197 = vmatpush.msra.mxu0 0.0
    %198 = vmatpush.msra.mxu0 %v178
    %199 = vmatmul.f32.gmra.mxu0 %v181
    %v200 = vpop.f32.mrf.mxu0
    %v201 = vadd.f32 0.0, %v200
    %202 = vdwg.mxu0
    %203 = vrot.lane.b32.xlu0 %v88, 64
    %v204 = vpop.permute.xlu0 %203
    %v207 = vsel %vm146, %v174, 0
    %209 = vmatpush.msra.mxu0 0.0
    %210 = vmatpush.msra.mxu0 0.0
    %211 = vmatpush.msra.mxu0 0.0
    %212 = vmatpush.msra.mxu0 0.0
    %213 = vmatpush.msra.mxu0 0.0
    %214 = vmatpush.msra.mxu0 0.0
    %215 = vmatpush.msra.mxu0 0.0
    %216 = vmatpush.msra.mxu0 0.0
    %217 = vmatpush.msra.mxu0 0.0
    %218 = vmatpush.msra.mxu0 0.0
    %219 = vmatpush.msra.mxu0 0.0
    %220 = vmatpush.msra.mxu0 0.0
    %221 = vmatpush.msra.mxu0 0.0
    %222 = vmatpush.msra.mxu0 0.0
    %223 = vmatpush.msra.mxu0 0.0
    %224 = vmatpush.msra.mxu0 %v204
    %225 = vmatmul.f32.gmra.mxu0 %v207
    %v226 = vpop.f32.mrf.mxu0
    %v227 = vadd.f32 0.0, %v226
    %228 = vdwg.mxu0
    %229 = vst.msk [vmem:[#allocation7] sm:$0xff] %vm60, %v201
    %230 = vst.msk [vmem:[#allocation7 + $0x8] sm:$0xff] %vm60, %v227
    // Predicated region
    $region22: #{tpu_custom_call.1} parent=1 // pred_check
      _
    $region23: #{tpu_custom_call.1} parent=1 // pred_check_branch
      %232 = sbr.rel (0) target = $region25
    $region24: #{tpu_custom_call.1} parent=1 // pred_region
      %234 = vsyncadd [#allocation4], 0
      %s235 = sshll.u32 [#allocation7], 4
      %s236 = int_to_ptr.vmem [resolvable:$true] %s235
      %s237 = sshll.u32 %s3, 4
      %s238 = int_to_ptr.hbm [resolvable:$true] %s237
      %243 = dma.vmem_to_hbm [thread:$0]  %s236, 256, %s238, [#allocation4], 128, 128, 8
    $region25: #{tpu_custom_call.1} parent=1 // pred_fallthru
      _
    // Predicated region
    $region26: #{tpu_custom_call.1} parent=1 // pred_check
      _
    $region27: #{tpu_custom_call.1} parent=1 // pred_check_branch
      %245 = sbr.rel (0) target = $region29
    $region28: #{tpu_custom_call.1} parent=1 // pred_region
      %247 = vsyncadd [#allocation9], 0
      %s248 = sshll.u32 [#allocation8], 4
      %s249 = int_to_ptr.vmem [resolvable:$true] %s248
      %s250 = sshll.u32 %s4, 4
      %s251 = int_to_ptr.hbm [resolvable:$true] %s250
      %256 = dma.vmem_to_hbm [thread:$0]  %s249, 256, %s251, [#allocation9], 128, 128, 8
    $region29: #{tpu_custom_call.1} parent=1 // pred_fallthru
      _
    // Predicated region
    $region30: #{tpu_custom_call.1} parent=1 // pred_check
      _
    $region31: #{tpu_custom_call.1} parent=1 // pred_check_branch
      %258 = sbr.rel (0) target = $region33
    $region32: #{tpu_custom_call.1} parent=1 // pred_region
      %260 = dma.done [#allocation4], 256
    $region33: #{tpu_custom_call.1} parent=1 // pred_fallthru
      _
    // Predicated region
    $region34: #{tpu_custom_call.1} parent=1 // pred_check
      _
    $region35: #{tpu_custom_call.1} parent=1 // pred_check_branch
      %262 = sbr.rel (0) target = $region37
    $region36: #{tpu_custom_call.1} parent=1 // pred_region
      %264 = dma.done [#allocation9], 256
    $region37: #{tpu_custom_call.1} parent=1 // pred_fallthru
      _
    %265 = vsyncpa [#allocation3], 1
    %266 = vsyncpa [#allocation6], 1
    %267 = vsyncpa [#allocation4], 1
    %268 = vsyncpa [#allocation9], 1

</llo_original>
